<compile_context>
chip_gen: v6e
topology: v6e:2x2x1
jax: 0.10.0
libtpu: 0.0.40
codegen_flags: <defaults>
</compile_context>

<pallas_src>
import functools

import numpy as np
import jax
import jax.numpy as jnp
from jax.experimental import pallas as pl
from jax.experimental.pallas import tpu as pltpu

_EPS = 1e-8  # matches torch.nn.CosineSimilarity default eps
_SUBLANE = {4: 8, 2: 16, 1: 32}  # dtype-aware second-minor alignment


def _round_up(x, m):
    return ((x + m - 1) // m) * m


def _vmem_capacity_bytes():
    try:
        return int(pltpu.get_tpu_info().vmem_capacity_bytes)
    except Exception:
        return 64 * 1024 * 1024  # conservative (v7x per-TC VMEM)


def _vmem_estimate(tile_rows, d, m_pad, k_neg, itemsize):
    return (2 * tile_rows * d * itemsize          # targets (double-buffered)
            + 2 * m_pad * d * itemsize            # resident label slab (2 bufs)
            + 2 * tile_rows * k_neg * 4           # negative indices
            + 2 * tile_rows * 4                   # per-row loss output
            + 2 * (tile_rows + m_pad) * d * 4     # f32 casts + normalized copies
            + 4 * tile_rows * m_pad * 4)          # sim / mask / exp temporaries


def _choose_tile_rows(n_rows, d, m_pad, k_neg, itemsize, requested):
    sub = _SUBLANE.get(itemsize, 8)
    if requested is not None:
        return _round_up(max(sub, int(requested)), sub)
    budget = _vmem_capacity_bytes() // 2          # generation-aware headroom
    tr = 512
    while tr > sub and _vmem_estimate(tr, d, m_pad, k_neg, itemsize) > budget:
        tr //= 2
    tr = min(max(tr, sub), _round_up(max(n_rows, 1), sub))
    return _round_up(tr, sub)


# ----------------------------------------------------------------------------
# Pallas kernel: per-row-tile cosine-sim block on the MXU + masked logsumexp.
# ----------------------------------------------------------------------------
def _contrastive_row_loss_kernel(t_ref, l_ref, neg_ref, o_ref, *,
                                 inv_temp, tile_rows, k_neg):
    i = pl.program_id(0)

    # Native-dtype tiles cast to f32 in VMEM (halves HBM traffic for bf16 inputs).
    t = t_ref[...].astype(jnp.float32)            # (TR, D) streamed target tile
    lab = l_ref[...].astype(jnp.float32)          # (M, D)  resident label slab

    # rsqrt on the EUP instead of sqrt + divide on the VALU.
    # rsqrt(max(||x||^2, eps^2)) == 1 / max(||x||, eps)  (torch eps semantics).
    eps2 = jnp.float32(_EPS * _EPS)
    t_n = t * jax.lax.rsqrt(jnp.maximum(jnp.sum(t * t, axis=-1, keepdims=True), eps2))
    l_n = lab * jax.lax.rsqrt(jnp.maximum(jnp.sum(lab * lab, axis=-1, keepdims=True), eps2))

    # All-pairs cosine similarities for this row tile on the MXU: (TR, M).
    sim = jax.lax.dot_general(t_n, l_n, (((1,), (1,)), ((), ())),
                              preferred_element_type=jnp.float32)
    logits = sim * jnp.float32(inv_temp)

    m_cols = lab.shape[0]
    row_ids = i * tile_rows + jax.lax.broadcasted_iota(jnp.int32, (tile_rows, 1), 0)
    col_ids = jax.lax.broadcasted_iota(jnp.int32, (tile_rows, m_cols), 1)

    # Candidate selection mask from indices: positive = own column, negatives =
    # K sampled columns.  Pure VPU compares, no gather, no (TR, K+1, D) tensor.
    pos_sel = col_ids == row_ids
    sel = pos_sel
    neg = neg_ref[...]                            # (TR, K) int32 global row ids
    for k in range(k_neg):
        sel = jnp.logical_or(sel, col_ids == neg[:, k:k + 1])

    # Masked logsumexp over the K+1 selected logits minus the positive logit.
    neg_big = jnp.float32(-1e30)
    m = jnp.max(jnp.where(sel, logits, neg_big), axis=-1, keepdims=True)
    p = jnp.where(sel, jnp.exp(logits - m), jnp.float32(0.0))
    lse = m + jnp.log(jnp.sum(p, axis=-1, keepdims=True))
    pos = jnp.sum(jnp.where(pos_sel, logits, jnp.float32(0.0)), axis=-1, keepdims=True)
    o_ref[...] = lse - pos                        # (TR, 1) per-row losses


def contrastive_row_losses_pallas(targets, labels, neg_idx, *, temperature,
                                  tile_rows=None):
    """targets/labels: (N, D) native dtype; neg_idx: (N, K) int32 global row ids.
    Returns (n_pad, 1) f32 per-row losses; rows >= N are padding (finite)."""
    n, d = targets.shape
    k_neg = int(neg_idx.shape[1])
    itemsize = jnp.dtype(targets.dtype).itemsize

    # Lane-dense similarity columns; label slab stays VMEM-resident.
    # TODO(synk): for very large N the label slab should become a second grid
    # axis (streamed column blocks) with an online logsumexp.
    m_pad = _round_up(max(n, 1), 128)
    tile_rows = _choose_tile_rows(n, d, m_pad, k_neg, itemsize, tile_rows)
    n_pad = _round_up(max(n, 1), tile_rows)

    if n_pad != n:
        targets = jnp.pad(targets, ((0, n_pad - n), (0, 0)))
        neg_idx = jnp.pad(neg_idx, ((0, n_pad - n), (0, 0)))
    if m_pad != n:
        labels = jnp.pad(labels, ((0, m_pad - n), (0, 0)))
    neg_idx = neg_idx.astype(jnp.int32)

    est = _vmem_estimate(tile_rows, d, m_pad, k_neg, itemsize)
    vmem_limit = int(min(_vmem_capacity_bytes(), max(32 << 20, 2 * est)))

    kernel = functools.partial(
        _contrastive_row_loss_kernel,
        inv_temp=float(1.0 / temperature),
        tile_rows=int(tile_rows),
        k_neg=k_neg,
    )
    return pl.pallas_call(
        kernel,
        out_shape=jax.ShapeDtypeStruct((n_pad, 1), jnp.float32),
        grid=(n_pad // tile_rows,),
        in_specs=[
            pl.BlockSpec((tile_rows, d), lambda i: (i, 0)),      # targets: streamed tiles
            pl.BlockSpec((m_pad, d), lambda i: (0, 0)),          # labels: DMA'd once, resident
            pl.BlockSpec((tile_rows, k_neg), lambda i: (i, 0)),  # negative indices
        ],
        out_specs=pl.BlockSpec((tile_rows, 1), lambda i: (i, 0)),
        compiler_params=pltpu.CompilerParams(
            dimension_semantics=("parallel",),                    # both TCs on v7x
            vmem_limit_bytes=vmem_limit),
    )(targets, labels, neg_idx)


# ----------------------------------------------------------------------------
# Host-side preparation (mask selection + negative sampling, index-level only).
# ----------------------------------------------------------------------------
def _prepare_contrastive_inputs(encoder_out, quantized_features,
                                time_mask_indices, num_negatives,
                                sampler_seed=0):
    mask = np.asarray(time_mask_indices).astype(bool)
    b, t = mask.shape
    d = encoder_out.shape[-1]
    k_neg = int(num_negatives)

    # Row-major masked selection order == torch boolean indexing order.
    rows, cols = np.nonzero(mask)
    flat_idx = jnp.asarray(rows * t + cols, dtype=jnp.int32)
    n_valid = int(flat_idx.shape[0])
    counts = mask.sum(axis=1)

    # Gathers stay on device and keep the model's native dtype (bf16 stays bf16).
    enc_flat = encoder_out.reshape(b * t, d)
    q_flat = quantized_features.reshape(b * t, d)
    targets = jnp.take(enc_flat, flat_idx, axis=0)   # (N, D)
    labels = jnp.take(q_flat, flat_idx, axis=0)      # (N, D)

    # TODO(synk): ragged, data-dependent random *index* generation has no clean
    # Pallas equivalent; only these small int32 indices are built host-side.
    rng = np.random.default_rng(sampler_seed)
    neg_idx = np.zeros((n_valid, k_neg), dtype=np.int32)
    start = 0
    for n_b in counts:
        n_b = int(n_b)
        if n_b == 0:
            continue
        if n_b - 1 < k_neg:
            raise ValueError("each batch element needs at least K+1 masked positions")
        # K distinct negatives per row from the other masked positions of the
        # same batch element (vectorized equivalent of the torch sampler).
        pick = np.argsort(rng.random((n_b, n_b - 1)), axis=1)[:, :k_neg]
        pick = pick + (pick >= np.arange(n_b)[:, None])   # skip own index
        neg_idx[start:start + n_b] = pick + start         # global row ids
        start += n_b

    return targets, labels, jnp.asarray(neg_idx, dtype=jnp.int32), n_valid


def contrastive_loss_forward(encoder_out, quantized_features, time_mask_indices,
                             *, temperature, num_negatives, sampler_seed=0,
                             tile_rows=None):
    """Mirrors ContrastiveLoss.forward (returns the scalar loss)."""
    targets, labels, neg_idx, n_valid = _prepare_contrastive_inputs(
        encoder_out, quantized_features, time_mask_indices, num_negatives,
        sampler_seed=sampler_seed)
    if n_valid == 0:
        raise ValueError("time_mask_indices selects no positions (empty mask).")
    row_losses = contrastive_row_losses_pallas(
        targets, labels, neg_idx, temperature=temperature, tile_rows=tile_rows)
    # Padded rows produce finite values; only the first n_valid rows contribute.
    return jnp.sum(row_losses[:n_valid, 0]) / jnp.float32(n_valid)


# ----------------------------------------------------------------------------
# Pure-JAX reference (for correctness check).
# ----------------------------------------------------------------------------
def _reference_loss(targets, labels, neg_idx, temperature):
    t = targets.astype(jnp.float32)
    lab = labels.astype(jnp.float32)
    n, k = neg_idx.shape
    negs = jnp.take(lab, neg_idx.reshape(-1), axis=0).reshape(n, k, -1)
    cand = jnp.concatenate([lab[:, None, :], negs], axis=1)        # positive at 0
    t_n = jnp.maximum(jnp.linalg.norm(t, axis=-1, keepdims=True), _EPS)
    c_n = jnp.maximum(jnp.linalg.norm(cand, axis=-1), _EPS)
    cos = jnp.sum(t[:, None, :] * cand, axis=-1) / (t_n * c_n)
    logits = cos / temperature
    return jnp.mean(jax.nn.logsumexp(logits, axis=-1) - logits[:, 0])


if __name__ == "__main__":
    key = jax.random.PRNGKey(0)
    B, T, D = 2, 16, 128          # batch, frames, feature dim (lane-dense)
    K = 4                         # negatives per target
    temperature = 0.1

    k1, k2 = jax.random.split(key)
    encoder_out = jax.random.normal(k1, (B, T, D), dtype=jnp.float32)
    quantized_features = jax.random.normal(k2, (B, T, D), dtype=jnp.float32)

    # Deterministic time mask: 6 masked frames per batch element (>= K+1, as the
    # PyTorch module requires).
    mask = np.zeros((B, T), dtype=bool)
    mask[0, 1:13:2] = True
    mask[1, 2:14:2] = True
    time_mask_indices = jnp.asarray(mask)

    loss = contrastive_loss_forward(
        encoder_out, quantized_features, time_mask_indices,
        temperature=temperature, num_negatives=K, sampler_seed=0,
        tile_rows=8)                       # small tile -> multiple grid steps
    loss = jax.block_until_ready(loss)

    # Reference check (same deterministic negative sampling).
    tgt, lab, neg_idx, n_valid = _prepare_contrastive_inputs(
        encoder_out, quantized_features, time_mask_indices, K, sampler_seed=0)
    ref = jax.block_until_ready(_reference_loss(tgt, lab, neg_idx, temperature))

    assert bool(jnp.isfinite(loss))
    np.testing.assert_allclose(float(loss), float(ref), rtol=5e-3, atol=5e-3)
    print("KERNEL_OK")
</pallas_src>

<mosaic_0001>
module attributes {stable_mosaic.version = 11 : i64} {
  func.func @_contrastive_row_loss_kernel(%arg0: i32, %arg1: memref<8x128xf32, #tpu.memory_space<vmem>>, %arg2: memref<128x128xf32, #tpu.memory_space<vmem>>, %arg3: memref<8x4xi32, #tpu.memory_space<vmem>>, %arg4: memref<8x1xf32, #tpu.memory_space<vmem>>) attributes {dimension_semantics = [#tpu.dimension_semantics<parallel>], iteration_bounds = array<i64: 2>, scalar_prefetch = 0 : i64, scratch_operands = 0 : i64, tpu.core_type = #tpu.core_type<tc>, window_params = [{transform_indices = @transform_0, window_bounds = array<i64: 8, 128>}, {pipeline_mode = #tpu.pipeline_mode<synchronous>, transform_indices = @transform_1, window_bounds = array<i64: 128, 128>}, {transform_indices = @transform_2, window_bounds = array<i64: 8, 4>}, {transform_indices = @transform_3, window_bounds = array<i64: 8, 1>}]} {
    %c0 = arith.constant 0 : index
    %c0_0 = arith.constant 0 : index
    %0 = vector.load %arg1[%c0, %c0_0] : memref<8x128xf32, #tpu.memory_space<vmem>>, vector<8x128xf32>
    %c0_1 = arith.constant 0 : index
    %c0_2 = arith.constant 0 : index
    %1 = vector.load %arg2[%c0_1, %c0_2] : memref<128x128xf32, #tpu.memory_space<vmem>>, vector<128x128xf32>
    %2 = arith.mulf %0, %0 : vector<8x128xf32>
    %cst = arith.constant dense<0.000000e+00> : vector<8xf32>
    %3 = vector.multi_reduction <add>, %2, %cst [1] : vector<8x128xf32> to vector<8xf32>
    %4 = vector.shape_cast %3 : vector<8xf32> to vector<8x1xf32>
    %cst_3 = arith.constant 1.000000e-16 : f32
    %5 = vector.broadcast %cst_3 : f32 to vector<8x1xf32>
    %6 = arith.maximumf %4, %5 : vector<8x1xf32>
    %7 = math.rsqrt %6 : vector<8x1xf32>
    %8 = vector.broadcast %7 : vector<8x1xf32> to vector<8x128xf32>
    %9 = arith.mulf %0, %8 : vector<8x128xf32>
    %10 = arith.mulf %1, %1 : vector<128x128xf32>
    %cst_4 = arith.constant dense<0.000000e+00> : vector<128xf32>
    %11 = vector.multi_reduction <add>, %10, %cst_4 [1] : vector<128x128xf32> to vector<128xf32>
    %12 = vector.shape_cast %11 : vector<128xf32> to vector<128x1xf32>
    %cst_5 = arith.constant 1.000000e-16 : f32
    %13 = vector.broadcast %cst_5 : f32 to vector<128x1xf32>
    %14 = arith.maximumf %12, %13 : vector<128x1xf32>
    %15 = math.rsqrt %14 : vector<128x1xf32>
    %16 = vector.broadcast %15 : vector<128x1xf32> to vector<128x128xf32>
    %17 = arith.mulf %1, %16 : vector<128x128xf32>
    %cst_6 = arith.constant dense<0.000000e+00> : vector<8x128xf32>
    %18 = tpu.matmul %9, %17, %cst_6 {dimension_numbers = #tpu.dot_dimension_numbers<[1], [1], [0], [0], [0, 0, 1, 0], [], []>} : vector<8x128xf32>, vector<128x128xf32>, vector<8x128xf32> -> vector<8x128xf32>
    %cst_7 = arith.constant 1.000000e+01 : f32
    %19 = vector.broadcast %cst_7 : f32 to vector<8x128xf32>
    %20 = arith.mulf %18, %19 : vector<8x128xf32>
    %c8_i32 = arith.constant 8 : i32
    %21 = arith.muli %arg0, %c8_i32 : i32
    %22 = tpu.iota {dimensions = array<i32: 0>} : vector<8x1xi32>
    %23 = vector.broadcast %21 : i32 to vector<8x1xi32>
    %24 = arith.addi %23, %22 : vector<8x1xi32>
    %25 = tpu.iota {dimensions = array<i32: 1>} : vector<8x128xi32>
    %26 = vector.broadcast %24 : vector<8x1xi32> to vector<8x128xi32>
    %27 = arith.cmpi eq, %25, %26 : vector<8x128xi32>
    %c0_8 = arith.constant 0 : index
    %c0_9 = arith.constant 0 : index
    %28 = vector.load %arg3[%c0_8, %c0_9] : memref<8x4xi32, #tpu.memory_space<vmem>>, vector<8x4xi32>
    %29 = vector.extract_strided_slice %28 {offsets = [0, 0], sizes = [8, 1], strides = [1, 1]} : vector<8x4xi32> to vector<8x1xi32>
    %30 = vector.broadcast %29 : vector<8x1xi32> to vector<8x128xi32>
    %31 = arith.cmpi eq, %25, %30 : vector<8x128xi32>
    %32 = arith.ori %27, %31 : vector<8x128xi1>
    %33 = vector.extract_strided_slice %28 {offsets = [0, 1], sizes = [8, 1], strides = [1, 1]} : vector<8x4xi32> to vector<8x1xi32>
    %34 = vector.broadcast %33 : vector<8x1xi32> to vector<8x128xi32>
    %35 = arith.cmpi eq, %25, %34 : vector<8x128xi32>
    %36 = arith.ori %32, %35 : vector<8x128xi1>
    %37 = vector.extract_strided_slice %28 {offsets = [0, 2], sizes = [8, 1], strides = [1, 1]} : vector<8x4xi32> to vector<8x1xi32>
    %38 = vector.broadcast %37 : vector<8x1xi32> to vector<8x128xi32>
    %39 = arith.cmpi eq, %25, %38 : vector<8x128xi32>
    %40 = arith.ori %36, %39 : vector<8x128xi1>
    %41 = vector.extract_strided_slice %28 {offsets = [0, 3], sizes = [8, 1], strides = [1, 1]} : vector<8x4xi32> to vector<8x1xi32>
    %42 = vector.broadcast %41 : vector<8x1xi32> to vector<8x128xi32>
    %43 = arith.cmpi eq, %25, %42 : vector<8x128xi32>
    %44 = arith.ori %40, %43 : vector<8x128xi1>
    %cst_10 = arith.constant -1.000000e+30 : f32
    %45 = vector.broadcast %cst_10 : f32 to vector<8x128xf32>
    %46 = arith.select %44, %20, %45 : vector<8x128xi1>, vector<8x128xf32>
    %cst_11 = arith.constant dense<0xFF800000> : vector<8xf32>
    %47 = vector.multi_reduction <maximumf>, %46, %cst_11 [1] : vector<8x128xf32> to vector<8xf32>
    %48 = vector.shape_cast %47 : vector<8xf32> to vector<8x1xf32>
    %49 = vector.broadcast %48 : vector<8x1xf32> to vector<8x128xf32>
    %50 = arith.subf %20, %49 : vector<8x128xf32>
    %51 = math.exp %50 : vector<8x128xf32>
    %cst_12 = arith.constant 0.000000e+00 : f32
    %52 = vector.broadcast %cst_12 : f32 to vector<8x128xf32>
    %53 = arith.select %44, %51, %52 : vector<8x128xi1>, vector<8x128xf32>
    %cst_13 = arith.constant dense<0.000000e+00> : vector<8xf32>
    %54 = vector.multi_reduction <add>, %53, %cst_13 [1] : vector<8x128xf32> to vector<8xf32>
    %55 = vector.shape_cast %54 : vector<8xf32> to vector<8x1xf32>
    %56 = math.log %55 : vector<8x1xf32>
    %57 = arith.addf %48, %56 : vector<8x1xf32>
    %cst_14 = arith.constant 0.000000e+00 : f32
    %58 = vector.broadcast %cst_14 : f32 to vector<8x128xf32>
    %59 = arith.select %27, %20, %58 : vector<8x128xi1>, vector<8x128xf32>
    %cst_15 = arith.constant dense<0.000000e+00> : vector<8xf32>
    %60 = vector.multi_reduction <add>, %59, %cst_15 [1] : vector<8x128xf32> to vector<8xf32>
    %61 = vector.shape_cast %60 : vector<8xf32> to vector<8x1xf32>
    %62 = arith.subf %57, %61 : vector<8x1xf32>
    %c0_16 = arith.constant 0 : index
    %c0_17 = arith.constant 0 : index
    %63 = vector.load %arg4[%c0_16, %c0_17] : memref<8x1xf32, #tpu.memory_space<vmem>>, vector<8x1xf32>
    tpu.vector_store %arg4[%c0_16, %c0_17], %62 {strides = array<i32>} : memref<8x1xf32, #tpu.memory_space<vmem>>, vector<8x1xf32>,
    return
  }
  func.func @transform_0(%arg0: i32) -> (i32, i32) {
    %c0_i32 = arith.constant 0 : i32
    %c0_i32_0 = arith.constant 0 : i32
    return %arg0, %c0_i32 : i32, i32
  }
  func.func @transform_1(%arg0: i32) -> (i32, i32) {
    %c0_i32 = arith.constant 0 : i32
    %c0_i32_0 = arith.constant 0 : i32
    %c0_i32_1 = arith.constant 0 : i32
    return %c0_i32, %c0_i32_0 : i32, i32
  }
  func.func @transform_2(%arg0: i32) -> (i32, i32) {
    %c0_i32 = arith.constant 0 : i32
    %c0_i32_0 = arith.constant 0 : i32
    return %arg0, %c0_i32 : i32, i32
  }
  func.func @transform_3(%arg0: i32) -> (i32, i32) {
    %c0_i32 = arith.constant 0 : i32
    %c0_i32_0 = arith.constant 0 : i32
    return %arg0, %c0_i32 : i32, i32
  }
}

</mosaic_0001>

<llo_original>
// kernel: tpu_custom_call.1
$region0: #{tpu_custom_call.1}
  #allocation0 [shape = 'u32[]', space=smem, size = 0x4, offset = 0x4, fixed_abs, tag = 'smem constant byte address 0x4 - core index']
  #allocation1 [shape = 'u32[144,128]{1,0:T(1,128)}', space=vmem, size = 0x12000, scoped, tag = 'internal scratch']
  %s0 = inlined_call_operand.vmem [shape: f32[16,128], index: 0, kind: input, shape index: {}]
  %s1 = inlined_call_operand.hbm [shape: f32[128,128], index: 1, kind: input, shape index: {}]
  %s2 = inlined_call_operand.vmem [shape: s32[16,4], index: 2, kind: input, shape index: {}]
  %s3 = inlined_call_operand.vmem [shape: f32[16,1], index: 3, kind: output, shape index: {}]
  %s4 = sld [smem:[#allocation0]]
  $region49: #{tpu_custom_call.1} parent=0
    _
  %s6 = ssub.s32 1, %s4
  %s7 = scalar_select 0, %s6, %s4
  $region1: #{tpu_custom_call.1} parent=0
    #allocation2 [shape = 'u8[65536]{0}', space=vmem, size = 0x10000, scoped, tag = 'input window, operand 1, single buffered']
    #allocation3 [shape = 's32[2]{0}', space=sflag, size = 0x8, scoped, tag = 'scoped memory for tpu_custom_call.1']
    %8 = vsyncpa [#allocation3], 0
    loop: start=0, step=1, limit=4
    $region2: #{tpu_custom_call.1} parent=1 // loop_pre_header
      _
    $region3: #{tpu_custom_call.1} parent=1 // loop_header
      %s10 = sphi 0, %s14
      %p11 = scmp.ge.s32.totalorder %s10, 4
      %s20 = sphi 0, %s22
      %s23 = sphi 0, %s20
      %s24 = sphi 0, %s23
      %s40 = sphi 0, %s24
      %s44 = sphi 0, %s44
      %s46 = sphi 0, %s44
      %s47 = sphi 0, %s46
      %s61 = sphi 0, %s47
      %s67 = sphi 0, %s69
      %s70 = sphi 0, %s67
      %s71 = sphi 0, %s70
      %s87 = sphi 0, %s71
      %s93 = sphi 0, %s95
      %s96 = sphi 0, %s93
      %s97 = sphi 0, %s96
      %s113 = sphi 0, %s97
    $region4: #{tpu_custom_call.1} parent=1 // loop_header_branch
      %13 = sbr.rel (%p11) target = $region8
    $region5: #{tpu_custom_call.1} parent=1 // loop_body
      %s15 = ssub.s32 %s10, 1
      %s16 = ssub.s32 %s10, 2
      %s17 = sadd.s32 %s10, 1
      %s18 = ssub.s32 %s10, %s17
      %p19 = scmp.eq.s32.totalorder %s18, 0
      %s21 = sadd.s32 %s20, 1
      %s22 = scalar_select %p19, %s20, %s21
      %p25 = pneg %p19
      %p26 = scmp.eq.s32.totalorder %s10, 1
      %p27 = por %p25, %p26
      %p28 = scmp.ne.s32.totalorder %s20, %s23
      %p29 = scmp.eq.s32.totalorder %s10, 0
      %p30 = por %p28, %p29
      %p31 = scmp.ne.s32.totalorder %s20, %s23
      %p32 = scmp.eq.s32.totalorder %s15, 1
      %p33 = por %p31, %p32
      %p34 = scmp.ne.s32.totalorder %s23, %s24
      %p35 = scmp.eq.s32.totalorder %s15, 0
      %p36 = por %p34, %p35
      %p37 = scmp.ne.s32.totalorder %s23, %s24
      %p38 = scmp.eq.s32.totalorder %s16, 1
      %p39 = por %p37, %p38
      %p41 = scmp.ne.s32.totalorder %s24, %s40
      %p42 = scmp.eq.s32.totalorder %s16, 0
      %p43 = por %p41, %p42
      %s45 = sadd.s32 %s44, 1
      %p48 = scmp.eq.s32.totalorder %s10, 1
      %p49 = scmp.ne.s32.totalorder %s44, %s46
      %p50 = scmp.eq.s32.totalorder %s10, 0
      %p51 = por %p49, %p50
      %p52 = scmp.ne.s32.totalorder %s44, %s46
      %p53 = scmp.eq.s32.totalorder %s15, 1
      %p54 = por %p52, %p53
      %p55 = scmp.ne.s32.totalorder %s46, %s47
      %p56 = scmp.eq.s32.totalorder %s15, 0
      %p57 = por %p55, %p56
      %p58 = scmp.ne.s32.totalorder %s46, %s47
      %p59 = scmp.eq.s32.totalorder %s16, 1
      %p60 = por %p58, %p59
      %p62 = scmp.ne.s32.totalorder %s47, %s61
      %p63 = scmp.eq.s32.totalorder %s16, 0
      %p64 = por %p62, %p63
      %s65 = ssub.s32 %s10, %s17
      %p66 = scmp.eq.s32.totalorder %s65, 0
      %s68 = sadd.s32 %s67, 1
      %s69 = scalar_select %p66, %s67, %s68
      %p72 = pneg %p66
      %p73 = scmp.eq.s32.totalorder %s10, 1
      %p74 = por %p72, %p73
      %p75 = scmp.ne.s32.totalorder %s67, %s70
      %p76 = scmp.eq.s32.totalorder %s10, 0
      %p77 = por %p75, %p76
      %p78 = scmp.ne.s32.totalorder %s67, %s70
      %p79 = scmp.eq.s32.totalorder %s15, 1
      %p80 = por %p78, %p79
      %p81 = scmp.ne.s32.totalorder %s70, %s71
      %p82 = scmp.eq.s32.totalorder %s15, 0
      %p83 = por %p81, %p82
      %p84 = scmp.ne.s32.totalorder %s70, %s71
      %p85 = scmp.eq.s32.totalorder %s16, 1
      %p86 = por %p84, %p85
      %p88 = scmp.ne.s32.totalorder %s71, %s87
      %p89 = scmp.eq.s32.totalorder %s16, 0
      %p90 = por %p88, %p89
      %s91 = ssub.s32 %s10, %s17
      %p92 = scmp.eq.s32.totalorder %s91, 0
      %s94 = sadd.s32 %s93, 1
      %s95 = scalar_select %p92, %s93, %s94
      %p98 = pneg %p92
      %p99 = scmp.eq.s32.totalorder %s10, 1
      %p100 = por %p98, %p99
      %p101 = scmp.ne.s32.totalorder %s93, %s96
      %p102 = scmp.eq.s32.totalorder %s10, 0
      %p103 = por %p101, %p102
      %p104 = scmp.ne.s32.totalorder %s93, %s96
      %p105 = scmp.eq.s32.totalorder %s15, 1
      %p106 = por %p104, %p105
      %p107 = scmp.ne.s32.totalorder %s96, %s97
      %p108 = scmp.eq.s32.totalorder %s15, 0
      %p109 = por %p107, %p108
      %p110 = scmp.ne.s32.totalorder %s96, %s97
      %p111 = scmp.eq.s32.totalorder %s16, 1
      %p112 = por %p110, %p111
      %p114 = scmp.ne.s32.totalorder %s97, %s113
      %p115 = scmp.eq.s32.totalorder %s16, 0
      %p116 = por %p114, %p115
      %p117 = scmp.le.s32.totalorder 1, %s10
      %p118 = scmp.lt.s32.totalorder %s10, 3
      %p119 = pnand %p117, %p118
      %p120 = pneg %p119
      // Predicated region
      $region9: #{tpu_custom_call.1} parent=5 // pred_check
        _
      $region10: #{tpu_custom_call.1} parent=5 // pred_check_branch
        %122 = sbr.rel (%p119) target = $region12
      $region11: #{tpu_custom_call.1} parent=5 // pred_region
        %s123 = ssub.s32 %s10, 1
        // Predicated region
        $region13: #{tpu_custom_call.1} parent=11 // pred_check
          %p124 = pneg %p57
        $region14: #{tpu_custom_call.1} parent=11 // pred_check_branch
          %126 = sbr.rel (%p124) target = $region16
        $region15: #{tpu_custom_call.1} parent=11 // pred_region
          %s128 = ssub.s32 2048, 2048
          %129 = vsyncadd [#allocation3], %s128
          %s130 = sshll.u32 [#allocation2], 4
          %s131 = int_to_ptr.vmem [resolvable:$true] %s130
          %136 = dma.hbm_to_vmem [thread:$0]  %s1, 2048, %s131, [#allocation3], 128, 128, 8
        $region16: #{tpu_custom_call.1} parent=11 // pred_fallthru
          _
      $region12: #{tpu_custom_call.1} parent=5 // pred_fallthru
        _
      %p137 = scmp.lt.s32.totalorder %s10, 2
      // Predicated region
      $region17: #{tpu_custom_call.1} parent=5 // pred_check
        %p138 = pneg %p137
      $region18: #{tpu_custom_call.1} parent=5 // pred_check_branch
        %140 = sbr.rel (%p138) target = $region20
      $region19: #{tpu_custom_call.1} parent=5 // pred_region
        // Predicated region
        $region21: #{tpu_custom_call.1} parent=19 // pred_check
          %p141 = pneg %p30
        $region22: #{tpu_custom_call.1} parent=19 // pred_check_branch
          %143 = sbr.rel (%p141) target = $region24
        $region23: #{tpu_custom_call.1} parent=19 // pred_region
          %p144 = scmp.lt.s32.totalorder %s10, 1
          %s145 = scalar_select %p144, %s10, 1
          %s146 = smul.addr %s145, 8
          %s147 = scalar_lea.vmem %s0, %s146
        $region24: #{tpu_custom_call.1} parent=19 // pred_fallthru
          _
        // Predicated region
        $region25: #{tpu_custom_call.1} parent=19 // pred_check
          %p148 = pneg %p77
        $region26: #{tpu_custom_call.1} parent=19 // pred_check_branch
          %150 = sbr.rel (%p148) target = $region28
        $region27: #{tpu_custom_call.1} parent=19 // pred_region
          %p151 = scmp.lt.s32.totalorder %s10, 1
          %s152 = scalar_select %p151, %s10, 1
          %s153 = smul.addr %s152, 8
          %s154 = scalar_lea.vmem %s2, %s153
        $region28: #{tpu_custom_call.1} parent=19 // pred_fallthru
          _
      $region20: #{tpu_custom_call.1} parent=5 // pred_fallthru
        _
      %p155 = scmp.le.s32.totalorder 1, %s10
      %p156 = scmp.lt.s32.totalorder %s10, 3
      %p157 = pnand %p155, %p156
      %p158 = pneg %p157
      // Predicated region
      $region29: #{tpu_custom_call.1} parent=5 // pred_check
        _
      $region30: #{tpu_custom_call.1} parent=5 // pred_check_branch
        %160 = sbr.rel (%p157) target = $region32
      $region31: #{tpu_custom_call.1} parent=5 // pred_region
        %s161 = ssub.s32 %s10, 1
        // Predicated region
        $region33: #{tpu_custom_call.1} parent=31 // pred_check
          %p162 = pneg %p57
        $region34: #{tpu_custom_call.1} parent=31 // pred_check_branch
          %164 = sbr.rel (%p162) target = $region36
        $region35: #{tpu_custom_call.1} parent=31 // pred_region
          %165 = dma.done [#allocation3], 2048
        $region36: #{tpu_custom_call.1} parent=31 // pred_fallthru
          _
        %p166 = scmp.lt.s32.totalorder %s15, 1
        %s167 = scalar_select %p166, %s15, 1
        %s168 = smul.addr %s167, 8
        %s169 = scalar_lea.vmem %s0, %s168
        %p170 = pneg %p36
        %p171 = pneg %p33
        %p172 = pneg %p57
        %p173 = pneg %p54
        %p174 = scmp.lt.s32.totalorder %s15, 1
        %s175 = scalar_select %p174, %s15, 1
        %s176 = smul.addr %s175, 8
        %s177 = scalar_lea.vmem %s2, %s176
        %p178 = pneg %p83
        %p179 = pneg %p80
        %p180 = pneg %p109
        %p181 = pneg %p106
        %p182 = scmp.lt.s32.totalorder %s15, 1
        %s183 = scalar_select %p182, %s15, 1
        %s184 = smul.addr %s183, 8
        %s185 = scalar_lea.vmem %s3, %s184
        %p186 = scmp.lt.s32.totalorder %s15, 1
        %s187 = scalar_select %p186, %s15, 1
        %s188 = smul.addr %s187, 8
        %s189 = scalar_lea.vmem %s0, %s188
        %p190 = scmp.lt.s32.totalorder %s15, 1
        %s191 = scalar_select %p190, %s15, 1
        %s192 = smul.addr %s191, 8
        %s193 = scalar_lea.vmem %s2, %s192
        %p194 = scmp.lt.s32.totalorder %s15, 1
        %s195 = scalar_select %p194, %s15, 1
        %s196 = smul.addr %s195, 8
        %s197 = scalar_lea.vmem %s3, %s196
        %v198 = vld [vmem:[%s189] sm:$0xff]
        %v199 = vld [vmem:[#allocation2] sm:$0xff]
        %v200 = vld [vmem:[#allocation2 + $0x8] sm:$0xff]
        %v201 = vld [vmem:[#allocation2 + $0x10] sm:$0xff]
        %v202 = vld [vmem:[#allocation2 + $0x18] sm:$0xff]
        %v203 = vld [vmem:[#allocation2 + $0x20] sm:$0xff]
        %v204 = vld [vmem:[#allocation2 + $0x28] sm:$0xff]
        %v205 = vld [vmem:[#allocation2 + $0x30] sm:$0xff]
        %v206 = vld [vmem:[#allocation2 + $0x38] sm:$0xff]
        %v207 = vld [vmem:[#allocation2 + $0x40] sm:$0xff]
        %v208 = vld [vmem:[#allocation2 + $0x48] sm:$0xff]
        %v209 = vld [vmem:[#allocation2 + $0x50] sm:$0xff]
        %v210 = vld [vmem:[#allocation2 + $0x58] sm:$0xff]
        %v211 = vld [vmem:[#allocation2 + $0x60] sm:$0xff]
        %v212 = vld [vmem:[#allocation2 + $0x68] sm:$0xff]
        %v213 = vld [vmem:[#allocation2 + $0x70] sm:$0xff]
        %v214 = vld [vmem:[#allocation2 + $0x78] sm:$0xff]
        %v215 = vmul.f32 %v198, %v198
        %216 = vadd.xlane.f32.xlu0 %v215
        %v217 = vpop.xlane.xlu0 %216
        %v218 = vmax.f32 %v217, 1e-16
        %v219 = vrsqrt.pop %v218
        %v220 = vmul.f32 %v198, %v219
        %v221 = vmul.f32 %v199, %v199
        %v222 = vmul.f32 %v200, %v200
        %v223 = vmul.f32 %v201, %v201
        %v224 = vmul.f32 %v202, %v202
        %v225 = vmul.f32 %v203, %v203
        %v226 = vmul.f32 %v204, %v204
        %v227 = vmul.f32 %v205, %v205
        %v228 = vmul.f32 %v206, %v206
        %v229 = vmul.f32 %v207, %v207
        %v230 = vmul.f32 %v208, %v208
        %v231 = vmul.f32 %v209, %v209
        %v232 = vmul.f32 %v210, %v210
        %v233 = vmul.f32 %v211, %v211
        %v234 = vmul.f32 %v212, %v212
        %v235 = vmul.f32 %v213, %v213
        %v236 = vmul.f32 %v214, %v214
        %237 = vadd.xlane.f32.xlu0 %v221
        %v238 = vpop.xlane.xlu0 %237
        %239 = vadd.xlane.f32.xlu0 %v222
        %v240 = vpop.xlane.xlu0 %239
        %241 = vadd.xlane.f32.xlu0 %v223
        %v242 = vpop.xlane.xlu0 %241
        %243 = vadd.xlane.f32.xlu0 %v224
        %v244 = vpop.xlane.xlu0 %243
        %245 = vadd.xlane.f32.xlu0 %v225
        %v246 = vpop.xlane.xlu0 %245
        %247 = vadd.xlane.f32.xlu0 %v226
        %v248 = vpop.xlane.xlu0 %247
        %249 = vadd.xlane.f32.xlu0 %v227
        %v250 = vpop.xlane.xlu0 %249
        %251 = vadd.xlane.f32.xlu0 %v228
        %v252 = vpop.xlane.xlu0 %251
        %253 = vadd.xlane.f32.xlu0 %v229
        %v254 = vpop.xlane.xlu0 %253
        %255 = vadd.xlane.f32.xlu0 %v230
        %v256 = vpop.xlane.xlu0 %255
        %257 = vadd.xlane.f32.xlu0 %v231
        %v258 = vpop.xlane.xlu0 %257
        %259 = vadd.xlane.f32.xlu0 %v232
        %v260 = vpop.xlane.xlu0 %259
        %261 = vadd.xlane.f32.xlu0 %v233
        %v262 = vpop.xlane.xlu0 %261
        %263 = vadd.xlane.f32.xlu0 %v234
        %v264 = vpop.xlane.xlu0 %263
        %265 = vadd.xlane.f32.xlu0 %v235
        %v266 = vpop.xlane.xlu0 %265
        %267 = vadd.xlane.f32.xlu0 %v236
        %v268 = vpop.xlane.xlu0 %267
        %v269 = vmax.f32 %v238, 1e-16
        %v270 = vmax.f32 %v240, 1e-16
        %v271 = vmax.f32 %v242, 1e-16
        %v272 = vmax.f32 %v244, 1e-16
        %v273 = vmax.f32 %v246, 1e-16
        %v274 = vmax.f32 %v248, 1e-16
        %v275 = vmax.f32 %v250, 1e-16
        %v276 = vmax.f32 %v252, 1e-16
        %v277 = vmax.f32 %v254, 1e-16
        %v278 = vmax.f32 %v256, 1e-16
        %v279 = vmax.f32 %v258, 1e-16
        %v280 = vmax.f32 %v260, 1e-16
        %v281 = vmax.f32 %v262, 1e-16
        %v282 = vmax.f32 %v264, 1e-16
        %v283 = vmax.f32 %v266, 1e-16
        %v284 = vmax.f32 %v268, 1e-16
        %v285 = vrsqrt.pop %v269
        %v286 = vrsqrt.pop %v270
        %v287 = vrsqrt.pop %v271
        %v288 = vrsqrt.pop %v272
        %v289 = vrsqrt.pop %v273
        %v290 = vrsqrt.pop %v274
        %v291 = vrsqrt.pop %v275
        %v292 = vrsqrt.pop %v276
        %v293 = vrsqrt.pop %v277
        %v294 = vrsqrt.pop %v278
        %v295 = vrsqrt.pop %v279
        %v296 = vrsqrt.pop %v280
        %v297 = vrsqrt.pop %v281
        %v298 = vrsqrt.pop %v282
        %v299 = vrsqrt.pop %v283
        %v300 = vrsqrt.pop %v284
        %v301 = vmul.f32 %v199, %v285
        %v302 = vmul.f32 %v200, %v286
        %v303 = vmul.f32 %v201, %v287
        %v304 = vmul.f32 %v202, %v288
        %v305 = vmul.f32 %v203, %v289
        %v306 = vmul.f32 %v204, %v290
        %v307 = vmul.f32 %v205, %v291
        %v308 = vmul.f32 %v206, %v292
        %v309 = vmul.f32 %v207, %v293
        %v310 = vmul.f32 %v208, %v294
        %v311 = vmul.f32 %v209, %v295
        %v312 = vmul.f32 %v210, %v296
        %v313 = vmul.f32 %v211, %v297
        %v314 = vmul.f32 %v212, %v298
        %v315 = vmul.f32 %v213, %v299
        %v316 = vmul.f32 %v214, %v300
        %317 = vmatprep.subr.mxu0 0.0
        %318 = vmatpush1.xpose.msra.mxu0 %v316
        %319 = vmatprep.subr.mxu0 0.0
        %320 = vmatpush1.xpose.msra.mxu0 %v315
        %321 = vmatprep.subr.mxu0 0.0
        %322 = vmatpush1.xpose.msra.mxu0 %v314
        %323 = vmatprep.subr.mxu0 0.0
        %324 = vmatpush1.xpose.msra.mxu0 %v313
        %325 = vmatprep.subr.mxu0 0.0
        %326 = vmatpush1.xpose.msra.mxu0 %v312
        %327 = vmatprep.subr.mxu0 0.0
        %328 = vmatpush1.xpose.msra.mxu0 %v311
        %329 = vmatprep.subr.mxu0 0.0
        %330 = vmatpush1.xpose.msra.mxu0 %v310
        %331 = vmatprep.subr.mxu0 0.0
        %332 = vmatpush1.xpose.msra.mxu0 %v309
        %333 = vmatprep.subr.mxu0 0.0
        %334 = vmatpush1.xpose.msra.mxu0 %v308
        %335 = vmatprep.subr.mxu0 0.0
        %336 = vmatpush1.xpose.msra.mxu0 %v307
        %337 = vmatprep.subr.mxu0 0.0
        %338 = vmatpush1.xpose.msra.mxu0 %v306
        %339 = vmatprep.subr.mxu0 0.0
        %340 = vmatpush1.xpose.msra.mxu0 %v305
        %341 = vmatprep.subr.mxu0 0.0
        %342 = vmatpush1.xpose.msra.mxu0 %v304
        %343 = vmatprep.subr.mxu0 0.0
        %344 = vmatpush1.xpose.msra.mxu0 %v303
        %345 = vmatprep.subr.mxu0 0.0
        %346 = vmatpush1.xpose.msra.mxu0 %v302
        %347 = vmatprep.subr.mxu0 0.0
        %348 = vmatpush1.xpose.msra.mxu0 %v301
        %349 = vmatprep.subr.mxu0 0.0
        %350 = vmatpush2.xpose.msra.mxu0 0.0
        %351 = vmatprep.subr.mxu0 0.0
        %352 = vmatpush2.xpose.msra.mxu0 0.0
        %353 = vmatprep.subr.mxu0 0.0
        %354 = vmatpush2.xpose.msra.mxu0 0.0
        %355 = vmatprep.subr.mxu0 0.0
        %356 = vmatpush2.xpose.msra.mxu0 0.0
        %357 = vmatprep.subr.mxu0 0.0
        %358 = vmatpush2.xpose.msra.mxu0 0.0
        %359 = vmatprep.subr.mxu0 0.0
        %360 = vmatpush2.xpose.msra.mxu0 0.0
        %361 = vmatprep.subr.mxu0 0.0
        %362 = vmatpush2.xpose.msra.mxu0 0.0
        %363 = vmatprep.subr.mxu0 0.0
        %364 = vmatpush2.xpose.msra.mxu0 0.0
        %365 = vmatprep.subr.mxu0 0.0
        %366 = vmatpush2.xpose.msra.mxu0 0.0
        %367 = vmatprep.subr.mxu0 0.0
        %368 = vmatpush2.xpose.msra.mxu0 0.0
        %369 = vmatprep.subr.mxu0 0.0
        %370 = vmatpush2.xpose.msra.mxu0 0.0
        %371 = vmatprep.subr.mxu0 0.0
        %372 = vmatpush2.xpose.msra.mxu0 0.0
        %373 = vmatprep.subr.mxu0 0.0
        %374 = vmatpush2.xpose.msra.mxu0 0.0
        %375 = vmatprep.subr.mxu0 0.0
        %376 = vmatpush2.xpose.msra.mxu0 0.0
        %377 = vmatprep.subr.mxu0 0.0
        %378 = vmatpush2.xpose.msra.mxu0 0.0
        %379 = vmatprep.subr.mxu0 0.0
        %380 = vmatpush2.xpose.msra.mxu0 0.0
        %381 = vmatprep.mubr.f32.mxu0 0.0
        %382 = vmatmul.mubr.f32.gmra.mxu0 %v220
        %v383 = vpop.f32.mrf.mxu0
        %v384 = vadd.f32 0.0, %v383
        %v385 = vpop.f32.mrf.mxu0
        %386 = vdwg.mxu0
        %v387 = vmul.f32 %v384, 10.0
        %s388 = smul.u32 %s15, 8
        %v389 = vlaneseq
        %v390 = vshrl.u32 %v389, 7
        %v391 = vstv %s388
        %v392 = vadd.s32 %v391, %v390
        %v393 = vlaneseq
        %v394 = vand.u32 %v393, 127
        %vm395 = vcmp.eq.s32.totalorder %v394, %v392
        %v396 = vld [vmem:[%s193] sm:$0xff]
        %397 = vset.pattern.permute.xlu0 0
        %398 = vperm.xlu0 %397, %v396
        %v399 = vpop.permute.xlu0 %398
        %vm400 = vcmp.eq.s32.totalorder %v394, %v399
        %vm401 = vmor %vm395, %vm400
        %402 = vset.pattern.permute.xlu0 1
        %403 = vperm.xlu0 %402, %v396
        %v404 = vpop.permute.xlu0 %403
        %vm405 = vcmp.eq.s32.totalorder %v394, %v404
        %vm406 = vmor %vm401, %vm405
        %407 = vset.pattern.permute.xlu0 2
        %408 = vperm.xlu0 %407, %v396
        %v409 = vpop.permute.xlu0 %408
        %vm410 = vcmp.eq.s32.totalorder %v394, %v409
        %vm411 = vmor %vm406, %vm410
        %412 = vset.pattern.permute.xlu0 3
        %413 = vperm.xlu0 %412, %v396
        %v414 = vpop.permute.xlu0 %413
        %vm415 = vcmp.eq.s32.totalorder %v394, %v414
        %vm416 = vmor %vm411, %vm415
        %v417 = vsel %vm416, %v387, -1e+30
        %418 = vmax.xlane.f32.xlu0 %v417
        %v419 = vpop.xlane.xlu0 %418
        %v420 = vsub.f32 %v387, %v419
        %v421 = vmul.f32 %v420, 1.442695
        %v422 = vpow.pop %v421
        %v423 = vsel %vm416, %v422, 0.0
        %424 = vadd.xlane.f32.xlu0 %v423
        %v425 = vpop.xlane.xlu0 %424
        %v426 = vlog2.pop %v425
        %v427 = vmul.f32 %v426, 0.6931472
        %v428 = vadd.f32 %v419, %v427
        %v429 = vsel %vm395, %v387, 0.0
        %430 = vadd.xlane.f32.xlu0 %v429
        %v431 = vpop.xlane.xlu0 %430
        %v432 = vsub.f32 %v428, %v431
        %vm433 = vcmask 7168
        %434 = vst.msk [vmem:[%s197] sm:$0xff] %vm433, %v432
        %p435 = scmp.lt.s32.totalorder %s15, 1
        %s436 = scalar_select %p435, %s15, 1
        %s437 = smul.addr %s436, 8
        %s438 = scalar_lea.vmem %s3, %s437
        // Predicated region
        $region37: #{tpu_custom_call.1} parent=31 // pred_check
          %p439 = pneg %p106
        $region38: #{tpu_custom_call.1} parent=31 // pred_check_branch
          %441 = sbr.rel (%p439) target = $region40
        $region39: #{tpu_custom_call.1} parent=31 // pred_region
          _
        $region40: #{tpu_custom_call.1} parent=31 // pred_fallthru
          _
      $region32: #{tpu_custom_call.1} parent=5 // pred_fallthru
        _
      %p442 = scmp.le.s32.totalorder 2, %s10
      // Predicated region
      $region41: #{tpu_custom_call.1} parent=5 // pred_check
        %p443 = pneg %p442
      $region42: #{tpu_custom_call.1} parent=5 // pred_check_branch
        %445 = sbr.rel (%p443) target = $region44
      $region43: #{tpu_custom_call.1} parent=5 // pred_region
        %s446 = ssub.s32 %s10, 2
        // Predicated region
        $region45: #{tpu_custom_call.1} parent=43 // pred_check
          %p447 = pneg %p112
        $region46: #{tpu_custom_call.1} parent=43 // pred_check_branch
          %449 = sbr.rel (%p447) target = $region48
        $region47: #{tpu_custom_call.1} parent=43 // pred_region
          %p450 = scmp.lt.s32.totalorder %s16, 1
          %s451 = scalar_select %p450, %s16, 1
          %s452 = smul.addr %s451, 8
          %s453 = scalar_lea.vmem %s3, %s452
        $region48: #{tpu_custom_call.1} parent=43 // pred_fallthru
          _
      $region44: #{tpu_custom_call.1} parent=5 // pred_fallthru
        _
    $region6: #{tpu_custom_call.1} parent=1 // loop_footer
      %s14 = sadd.s32 1, %s10
    $region7: #{tpu_custom_call.1} parent=1 // loop_footer_branch
      %9 = sbr.rel target = $region3
    $region8: #{tpu_custom_call.1} parent=1 // loop_exit
      _
    %454 = vsyncpa [#allocation3], 1
    %s455 = scalar_lea.sflag [#allocation3], 1
    %456 = vsyncpa %s455, 1

</llo_original>
